<compile_context>
chip_gen: v7x
topology: tpu7x:2x2x1
jax: 0.10.0
libtpu: 0.0.40
codegen_flags: <defaults>
</compile_context>

<pallas_src>
import functools

import jax
import jax.numpy as jnp
from jax.experimental import pallas as pl
from jax.experimental.pallas import tpu as pltpu


def _round_up(x: int, m: int) -> int:
    return (x + m - 1) // m * m


def _cdiv(a: int, b: int) -> int:
    return (a + b - 1) // b


def _vmem_capacity_bytes() -> int:
    """Physical VMEM per TensorCore; conservative fallback (v7x = 64 MiB)."""
    try:
        info = pltpu.get_tpu_info()
        cap = getattr(info, "vmem_capacity_bytes", None)
        if cap:
            return int(cap)
    except Exception:
        pass
    return 64 << 20


def _block_spec(shape, index_map, buffers=None):
    """BlockSpec with optional buffer-count override (ignored on older JAX)."""
    if buffers is not None:
        try:
            return pl.BlockSpec(shape, index_map, pipeline_mode=pl.Buffered(buffers))
        except (TypeError, AttributeError):
            pass
    return pl.BlockSpec(shape, index_map)


def _nonlinear_kernel(x_ref, w1_ref, w2_ref, b1_ref, b2_ref, o_ref):
    # x:(TB,Fp)  w1/w2:(Fp,TN)  b1/b2:(1,TN)  o:(TB,TN)
    x = x_ref[...]
    z1 = jnp.dot(x, w1_ref[...], preferred_element_type=jnp.float32) + b1_ref[...]
    z2 = jnp.dot(x, w2_ref[...], preferred_element_type=jnp.float32) + b2_ref[...]
    # Gated nonlinearity: exactly two EUP transcendentals per output element.
    o_ref[...] = (jnp.tanh(z1) * jax.nn.sigmoid(z2)).astype(o_ref.dtype)


def _choose_tiles(B, Fp, x_item, w_item, tb_req, budget):
    TB = min(_round_up(tb_req, 8), _round_up(max(B, 1), 8))
    if B > 8:
        # >= 2 batch tiles whenever possible so v7x's two TensorCores both work.
        TB = min(TB, _round_up(_cdiv(B, 2), 8))

    def footprint(tb, tn):
        n_tiles = _cdiv(Fp, tn)
        wbuf = 1 if n_tiles == 1 else 2            # resident weights single-buffered
        return (2 * wbuf * Fp * tn * w_item        # w1 + w2 tiles
                + 2 * wbuf * tn * 4                # b1 + b2 tiles (f32)
                + 2 * tb * Fp * x_item             # x tile, double-buffered
                + 2 * tb * tn * x_item             # out tile, double-buffered
                + 2 * tb * tn * 4)                 # f32 z1 / z2 intermediates

    TN = Fp
    while footprint(TB, TN) > budget and TN > 512:
        TN = _round_up(TN // 2, 128)
    while footprint(TB, TN) > budget and TB > 64:
        TB = max(64, _round_up(TB // 2, 8))
    return TB, TN, footprint(TB, TN)


@functools.partial(
    jax.jit,
    static_argnames=("f_size", "tb", "matmul_dtype", "single_buffer_weights"),
)
def _nonlinear_padded(x, w1_p, w2_p, b1_p, b2_p, *, f_size, tb, matmul_dtype,
                      single_buffer_weights):
    B = x.shape[0]
    Fp = w1_p.shape[0]
    out_dtype = x.dtype

    # Lane-pad the feature dim only; the batch dim is never padded or copied.
    if x.shape[1] < Fp:
        x = jnp.pad(x, ((0, 0), (0, Fp - x.shape[1])))
    if matmul_dtype is not None:
        x = x.astype(matmul_dtype)

    x_item = jnp.dtype(x.dtype).itemsize
    w_item = jnp.dtype(w1_p.dtype).itemsize

    phys = _vmem_capacity_bytes()
    budget = max(phys // 2, 24 << 20)
    TB, TN, fp_bytes = _choose_tiles(B, Fp, x_item, w_item, tb, budget)
    n_tiles = _cdiv(Fp, TN)
    b_tiles = _cdiv(B, TB)
    w_buffers = 1 if (n_tiles == 1 and single_buffer_weights) else None

    # Raise the scoped VMEM limit when needed, but never beyond physical - 8 MiB
    # (v7x physical is only 64 MiB; v5e default scoped limit is only 16 MiB).
    vmem_limit = int(min(phys - (8 << 20), max(2 * fp_bytes, 32 << 20)))
    cp = pltpu.CompilerParams(
        dimension_semantics=("parallel", "parallel"),
        vmem_limit_bytes=vmem_limit,
    )

    cost = pl.CostEstimate(
        flops=4 * B * f_size * f_size,            # two (B,F)x(F,F) matmuls
        transcendentals=2 * B * f_size,           # tanh + sigmoid
        bytes_accessed=(2 * B * Fp * x_item       # x in + out
                        + 2 * Fp * Fp * w_item    # w1 + w2
                        + 2 * Fp * 4),            # b1 + b2
    )

    out_p = pl.pallas_call(
        _nonlinear_kernel,
        out_shape=jax.ShapeDtypeStruct((B, Fp), out_dtype),
        grid=(n_tiles, b_tiles),                  # weight tile outer, batch inner
        in_specs=[
            pl.BlockSpec((TB, Fp), lambda j, i: (i, 0)),             # x (streams)
            _block_spec((Fp, TN), lambda j, i: (0, j), w_buffers),   # w1
            _block_spec((Fp, TN), lambda j, i: (0, j), w_buffers),   # w2
            _block_spec((1, TN), lambda j, i: (0, j), w_buffers),    # b1
            _block_spec((1, TN), lambda j, i: (0, j), w_buffers),    # b2
        ],
        out_specs=pl.BlockSpec((TB, TN), lambda j, i: (i, j)),
        compiler_params=cp,
        cost_estimate=cost,
    )(x, w1_p, w2_p, b1_p, b2_p)

    return out_p[:, :f_size]


def prepare_params(w1, b1, w2, b2, *, param_dtype=None):
    """Pad (and optionally cast) the two Linear layers ONCE, outside the hot path.

    w1, w2: (F_in, F_out) = transpose of PyTorch's nn.Linear weight; b1, b2: (F,).
    """
    F = w1.shape[0]
    Fp = _round_up(max(F, 1), 128)
    if param_dtype is not None:
        w1 = w1.astype(param_dtype)
        w2 = w2.astype(param_dtype)
    w1_p = jnp.zeros((Fp, Fp), w1.dtype).at[:F, :F].set(w1)
    w2_p = jnp.zeros((Fp, Fp), w2.dtype).at[:F, :F].set(w2)
    b1_p = jnp.zeros((1, Fp), jnp.float32).at[0, :F].set(b1.astype(jnp.float32))
    b2_p = jnp.zeros((1, Fp), jnp.float32).at[0, :F].set(b2.astype(jnp.float32))
    return {"w1": w1_p, "w2": w2_p, "b1": b1_p, "b2": b2_p, "f_size": F}


def nonlinear_layer_prepared(x, params, *, tb=256, matmul_dtype=None):
    """Apply the layer with pre-padded params. Supports (..., F) inputs."""
    lead = x.shape[:-1]
    x2 = x.reshape((-1, x.shape[-1]))
    kwargs = dict(f_size=params["f_size"], tb=tb, matmul_dtype=matmul_dtype)
    try:
        out = _nonlinear_padded(x2, params["w1"], params["w2"], params["b1"],
                                params["b2"], single_buffer_weights=True, **kwargs)
    except Exception:
        # Fallback: if single-buffered resident weights are rejected by this
        # JAX/Mosaic version, retry with default double-buffering.
        out = _nonlinear_padded(x2, params["w1"], params["w2"], params["b1"],
                                params["b2"], single_buffer_weights=False, **kwargs)
    return out.reshape(lead + (params["f_size"],))


def nonlinear_layer(x, w1, b1, w2, b2, *, tb=256, matmul_dtype=None):
    """Convenience wrapper (pads params per call; prefer prepare_params + *_prepared)."""
    params = prepare_params(w1, b1, w2, b2, param_dtype=matmul_dtype)
    return nonlinear_layer_prepared(x, params, tb=tb, matmul_dtype=matmul_dtype)


def _init_linear_params(key, f_size, dtype=jnp.float32):
    """Deterministic init mimicking nn.Linear defaults (uniform +/- 1/sqrt(fan_in))."""
    kw, kb = jax.random.split(key)
    bound = 1.0 / jnp.sqrt(f_size)
    # Stored as (F_in, F_out) == transpose of PyTorch's (out, in) weight.
    w = jax.random.uniform(kw, (f_size, f_size), dtype, -bound, bound)
    b = jax.random.uniform(kb, (f_size,), dtype, -bound, bound)
    return w, b


if __name__ == "__main__":
    key = jax.random.PRNGKey(0)
    k_x, k_fc1, k_fc2 = jax.random.split(key, 3)

    batch, f_size = 8, 32
    x = jax.random.normal(k_x, (batch, f_size), jnp.float32)
    w1, b1 = _init_linear_params(k_fc1, f_size)
    w2, b2 = _init_linear_params(k_fc2, f_size)

    # Hoist parameter padding/layout out of the per-call path.
    params = prepare_params(w1, b1, w2, b2)
    out = nonlinear_layer_prepared(x, params)
    out = jax.block_until_ready(out)

    # Pure-JAX reference check.
    ref = jnp.tanh(x @ w1 + b1) * jax.nn.sigmoid(x @ w2 + b2)
    assert out.shape == (batch, f_size)
    assert jnp.allclose(out, ref, atol=1e-5, rtol=1e-5), float(jnp.max(jnp.abs(out - ref)))

    print("KERNEL_OK")
</pallas_src>

<mosaic_0001>
module attributes {stable_mosaic.version = 11 : i64} {
  func.func @_nonlinear_kernel(%arg0: i32, %arg1: i32, %arg2: memref<8x128xf32, #tpu.memory_space<vmem>>, %arg3: memref<128x128xf32, #tpu.memory_space<vmem>>, %arg4: memref<128x128xf32, #tpu.memory_space<vmem>>, %arg5: memref<1x128xf32, #tpu.memory_space<vmem>>, %arg6: memref<1x128xf32, #tpu.memory_space<vmem>>, %arg7: memref<8x128xf32, #tpu.memory_space<vmem>>) attributes {dimension_semantics = [#tpu.dimension_semantics<parallel>, #tpu.dimension_semantics<parallel>], iteration_bounds = array<i64: 1, 1>, scalar_prefetch = 0 : i64, scratch_operands = 0 : i64, tpu.core_type = #tpu.core_type<tc>, window_params = [{transform_indices = @transform_0, window_bounds = array<i64: 8, 128>}, {pipeline_mode = #tpu.pipeline_mode<synchronous>, transform_indices = @transform_1, window_bounds = array<i64: 128, 128>}, {pipeline_mode = #tpu.pipeline_mode<synchronous>, transform_indices = @transform_2, window_bounds = array<i64: 128, 128>}, {pipeline_mode = #tpu.pipeline_mode<synchronous>, transform_indices = @transform_3, window_bounds = array<i64: 1, 128>}, {pipeline_mode = #tpu.pipeline_mode<synchronous>, transform_indices = @transform_4, window_bounds = array<i64: 1, 128>}, {transform_indices = @transform_5, window_bounds = array<i64: 8, 128>}]} {
    %c0 = arith.constant 0 : index
    %c0_0 = arith.constant 0 : index
    %0 = vector.load %arg2[%c0, %c0_0] : memref<8x128xf32, #tpu.memory_space<vmem>>, vector<8x128xf32>
    %c0_1 = arith.constant 0 : index
    %c0_2 = arith.constant 0 : index
    %1 = vector.load %arg3[%c0_1, %c0_2] : memref<128x128xf32, #tpu.memory_space<vmem>>, vector<128x128xf32>
    %cst = arith.constant dense<0.000000e+00> : vector<8x128xf32>
    %2 = tpu.matmul %0, %1, %cst {dimension_numbers = #tpu.dot_dimension_numbers<[1], [0], [0], [1], [0, 0, 1, 1], [], []>} : vector<8x128xf32>, vector<128x128xf32>, vector<8x128xf32> -> vector<8x128xf32>
    %c0_3 = arith.constant 0 : index
    %c0_4 = arith.constant 0 : index
    %3 = vector.load %arg5[%c0_3, %c0_4] : memref<1x128xf32, #tpu.memory_space<vmem>>, vector<1x128xf32>
    %4 = vector.broadcast %3 : vector<1x128xf32> to vector<8x128xf32>
    %5 = arith.addf %2, %4 : vector<8x128xf32>
    %c0_5 = arith.constant 0 : index
    %c0_6 = arith.constant 0 : index
    %6 = vector.load %arg4[%c0_5, %c0_6] : memref<128x128xf32, #tpu.memory_space<vmem>>, vector<128x128xf32>
    %cst_7 = arith.constant dense<0.000000e+00> : vector<8x128xf32>
    %7 = tpu.matmul %0, %6, %cst_7 {dimension_numbers = #tpu.dot_dimension_numbers<[1], [0], [0], [1], [0, 0, 1, 1], [], []>} : vector<8x128xf32>, vector<128x128xf32>, vector<8x128xf32> -> vector<8x128xf32>
    %c0_8 = arith.constant 0 : index
    %c0_9 = arith.constant 0 : index
    %8 = vector.load %arg6[%c0_8, %c0_9] : memref<1x128xf32, #tpu.memory_space<vmem>>, vector<1x128xf32>
    %9 = vector.broadcast %8 : vector<1x128xf32> to vector<8x128xf32>
    %10 = arith.addf %7, %9 : vector<8x128xf32>
    %11 = math.tanh %5 : vector<8x128xf32>
    %12 = arith.negf %10 : vector<8x128xf32>
    %13 = math.exp %12 : vector<8x128xf32>
    %cst_10 = arith.constant 1.000000e+00 : f32
    %14 = vector.broadcast %cst_10 : f32 to vector<8x128xf32>
    %15 = arith.addf %14, %13 : vector<8x128xf32>
    %16 = arith.divf %14, %15 : vector<8x128xf32>
    %17 = arith.mulf %11, %16 : vector<8x128xf32>
    %c0_11 = arith.constant 0 : index
    %c0_12 = arith.constant 0 : index
    %18 = vector.load %arg7[%c0_11, %c0_12] : memref<8x128xf32, #tpu.memory_space<vmem>>, vector<8x128xf32>
    tpu.vector_store %arg7[%c0_11, %c0_12], %17 {strides = array<i32>} : memref<8x128xf32, #tpu.memory_space<vmem>>, vector<8x128xf32>,
    return
  }
  func.func @transform_0(%arg0: i32, %arg1: i32) -> (i32, i32) {
    %c0_i32 = arith.constant 0 : i32
    %c0_i32_0 = arith.constant 0 : i32
    return %arg1, %c0_i32 : i32, i32
  }
  func.func @transform_1(%arg0: i32, %arg1: i32) -> (i32, i32) {
    %c0_i32 = arith.constant 0 : i32
    %c0_i32_0 = arith.constant 0 : i32
    return %c0_i32, %arg0 : i32, i32
  }
  func.func @transform_2(%arg0: i32, %arg1: i32) -> (i32, i32) {
    %c0_i32 = arith.constant 0 : i32
    %c0_i32_0 = arith.constant 0 : i32
    return %c0_i32, %arg0 : i32, i32
  }
  func.func @transform_3(%arg0: i32, %arg1: i32) -> (i32, i32) {
    %c0_i32 = arith.constant 0 : i32
    %c0_i32_0 = arith.constant 0 : i32
    return %c0_i32, %arg0 : i32, i32
  }
  func.func @transform_4(%arg0: i32, %arg1: i32) -> (i32, i32) {
    %c0_i32 = arith.constant 0 : i32
    %c0_i32_0 = arith.constant 0 : i32
    return %c0_i32, %arg0 : i32, i32
  }
  func.func @transform_5(%arg0: i32, %arg1: i32) -> (i32, i32) {
    %c0_i32 = arith.constant 0 : i32
    return %arg1, %arg0 : i32, i32
  }
}

module attributes {stable_mosaic.version = 11 : i64} {
  func.func @_nonlinear_kernel(%arg0: i32, %arg1: i32, %arg2: memref<8x128xf32, #tpu.memory_space<vmem>>, %arg3: memref<128x128xf32, #tpu.memory_space<vmem>>, %arg4: memref<128x128xf32, #tpu.memory_space<vmem>>, %arg5: memref<1x128xf32, #tpu.memory_space<vmem>>, %arg6: memref<1x128xf32, #tpu.memory_space<vmem>>, %arg7: memref<8x128xf32, #tpu.memory_space<vmem>>) attributes {dimension_semantics = [#tpu.dimension_semantics<parallel>, #tpu.dimension_semantics<parallel>], iteration_bounds = array<i64: 1, 1>, scalar_prefetch = 0 : i64, scratch_operands = 0 : i64, tpu.core_type = #tpu.core_type<tc>, window_params = [{transform_indices = @transform_0, window_bounds = array<i64: 8, 128>}, {transform_indices = @transform_1, window_bounds = array<i64: 128, 128>}, {transform_indices = @transform_2, window_bounds = array<i64: 128, 128>}, {transform_indices = @transform_3, window_bounds = array<i64: 1, 128>}, {transform_indices = @transform_4, window_bounds = array<i64: 1, 128>}, {transform_indices = @transform_5, window_bounds = array<i64: 8, 128>}]} {
    %c0 = arith.constant 0 : index
    %c0_0 = arith.constant 0 : index
    %0 = vector.load %arg2[%c0, %c0_0] : memref<8x128xf32, #tpu.memory_space<vmem>>, vector<8x128xf32>
    %c0_1 = arith.constant 0 : index
    %c0_2 = arith.constant 0 : index
    %1 = vector.load %arg3[%c0_1, %c0_2] : memref<128x128xf32, #tpu.memory_space<vmem>>, vector<128x128xf32>
    %cst = arith.constant dense<0.000000e+00> : vector<8x128xf32>
    %2 = tpu.matmul %0, %1, %cst {dimension_numbers = #tpu.dot_dimension_numbers<[1], [0], [0], [1], [0, 0, 1, 1], [], []>} : vector<8x128xf32>, vector<128x128xf32>, vector<8x128xf32> -> vector<8x128xf32>
    %c0_3 = arith.constant 0 : index
    %c0_4 = arith.constant 0 : index
    %3 = vector.load %arg5[%c0_3, %c0_4] : memref<1x128xf32, #tpu.memory_space<vmem>>, vector<1x128xf32>
    %4 = vector.broadcast %3 : vector<1x128xf32> to vector<8x128xf32>
    %5 = arith.addf %2, %4 : vector<8x128xf32>
    %c0_5 = arith.constant 0 : index
    %c0_6 = arith.constant 0 : index
    %6 = vector.load %arg4[%c0_5, %c0_6] : memref<128x128xf32, #tpu.memory_space<vmem>>, vector<128x128xf32>
    %cst_7 = arith.constant dense<0.000000e+00> : vector<8x128xf32>
    %7 = tpu.matmul %0, %6, %cst_7 {dimension_numbers = #tpu.dot_dimension_numbers<[1], [0], [0], [1], [0, 0, 1, 1], [], []>} : vector<8x128xf32>, vector<128x128xf32>, vector<8x128xf32> -> vector<8x128xf32>
    %c0_8 = arith.constant 0 : index
    %c0_9 = arith.constant 0 : index
    %8 = vector.load %arg6[%c0_8, %c0_9] : memref<1x128xf32, #tpu.memory_space<vmem>>, vector<1x128xf32>
    %9 = vector.broadcast %8 : vector<1x128xf32> to vector<8x128xf32>
    %10 = arith.addf %7, %9 : vector<8x128xf32>
    %11 = math.tanh %5 : vector<8x128xf32>
    %12 = arith.negf %10 : vector<8x128xf32>
    %13 = math.exp %12 : vector<8x128xf32>
    %cst_10 = arith.constant 1.000000e+00 : f32
    %14 = vector.broadcast %cst_10 : f32 to vector<8x128xf32>
    %15 = arith.addf %14, %13 : vector<8x128xf32>
    %16 = arith.divf %14, %15 : vector<8x128xf32>
    %17 = arith.mulf %11, %16 : vector<8x128xf32>
    %c0_11 = arith.constant 0 : index
    %c0_12 = arith.constant 0 : index
    %18 = vector.load %arg7[%c0_11, %c0_12] : memref<8x128xf32, #tpu.memory_space<vmem>>, vector<8x128xf32>
    tpu.vector_store %arg7[%c0_11, %c0_12], %17 {strides = array<i32>} : memref<8x128xf32, #tpu.memory_space<vmem>>, vector<8x128xf32>,
    return
  }
  func.func @transform_0(%arg0: i32, %arg1: i32) -> (i32, i32) {
    %c0_i32 = arith.constant 0 : i32
    %c0_i32_0 = arith.constant 0 : i32
    return %arg1, %c0_i32 : i32, i32
  }
  func.func @transform_1(%arg0: i32, %arg1: i32) -> (i32, i32) {
    %c0_i32 = arith.constant 0 : i32
    %c0_i32_0 = arith.constant 0 : i32
    return %c0_i32, %arg0 : i32, i32
  }
  func.func @transform_2(%arg0: i32, %arg1: i32) -> (i32, i32) {
    %c0_i32 = arith.constant 0 : i32
    %c0_i32_0 = arith.constant 0 : i32
    return %c0_i32, %arg0 : i32, i32
  }
  func.func @transform_3(%arg0: i32, %arg1: i32) -> (i32, i32) {
    %c0_i32 = arith.constant 0 : i32
    %c0_i32_0 = arith.constant 0 : i32
    return %c0_i32, %arg0 : i32, i32
  }
  func.func @transform_4(%arg0: i32, %arg1: i32) -> (i32, i32) {
    %c0_i32 = arith.constant 0 : i32
    %c0_i32_0 = arith.constant 0 : i32
    return %c0_i32, %arg0 : i32, i32
  }
  func.func @transform_5(%arg0: i32, %arg1: i32) -> (i32, i32) {
    %c0_i32 = arith.constant 0 : i32
    return %arg1, %arg0 : i32, i32
  }
}

</mosaic_0001>

<llo_original>
// kernel: _nonlinear_padded.1
$region0: #{_nonlinear_padded.1}
  #allocation0 [shape = 'u32[]', space=smem, size = 0x4, offset = 0x4, fixed_abs, tag = 'smem constant byte address 0x4 - core index']
  #allocation1 [shape = 'u32[144,128]{1,0:T(1,128)}', space=vmem, size = 0x12000, scoped, tag = 'internal scratch']
  %s0 = inlined_call_operand.vmem [shape: f32[8,128], index: 0, kind: input, shape index: {}]
  %s1 = inlined_call_operand.hbm [shape: f32[128,128], index: 1, kind: input, shape index: {}]
  %s2 = inlined_call_operand.hbm [shape: f32[128,128], index: 2, kind: input, shape index: {}]
  %s3 = inlined_call_operand.vmem [shape: f32[1,128], index: 3, kind: input, shape index: {}]
  %s4 = inlined_call_operand.vmem [shape: f32[1,128], index: 4, kind: input, shape index: {}]
  %s5 = inlined_call_operand.hbm [shape: f32[8,128], index: 5, kind: output, shape index: {}]
  %s6 = sld [smem:[#allocation0]]
  $region38: #{_nonlinear_padded.1} parent=0
    _
  %s8 = ssub.s32 1, %s6
  %s9 = scalar_select 0, %s8, %s6
  $region1: #{_nonlinear_padded.1} parent=0
    #allocation2 [shape = 'u8[65536]{0}', space=vmem, size = 0x10000, scoped, tag = 'input window, operand 1, single buffered']
    #allocation3 [shape = 's32[1]{0}', space=sflag, size = 0x4, scoped, tag = 'scoped memory for _nonlinear_padded.1']
    #allocation4 [shape = 's32[1]{0}', space=sflag, size = 0x4, scoped, tag = 'scoped memory for _nonlinear_padded.1']
    #allocation5 [shape = 'u8[65536]{0}', space=vmem, size = 0x10000, scoped, tag = 'input window, operand 2, single buffered']
    #allocation6 [shape = 's32[1]{0}', space=sflag, size = 0x4, scoped, tag = 'scoped memory for _nonlinear_padded.1']
    #allocation7 [shape = 'u8[4096]{0}', space=vmem, size = 0x1000, scoped, tag = 'output window, operand 0, single buffered']
    %10 = vsyncpa [#allocation3], 0
    %11 = vsyncpa [#allocation6], 0
    %12 = vsyncpa [#allocation4], 0
    // Predicated region
    $region2: #{_nonlinear_padded.1} parent=1 // pred_check
      _
    $region3: #{_nonlinear_padded.1} parent=1 // pred_check_branch
      %14 = sbr.rel (0) target = $region5
    $region4: #{_nonlinear_padded.1} parent=1 // pred_region
      _
    $region5: #{_nonlinear_padded.1} parent=1 // pred_fallthru
      _
    // Predicated region
    $region6: #{_nonlinear_padded.1} parent=1 // pred_check
      _
    $region7: #{_nonlinear_padded.1} parent=1 // pred_check_branch
      %16 = sbr.rel (0) target = $region9
    $region8: #{_nonlinear_padded.1} parent=1 // pred_region
      %s18 = ssub.s32 2048, 2048
      %19 = vsyncadd [#allocation3], %s18
      %s20 = sshll.u32 [#allocation2], 4
      %s21 = int_to_ptr.vmem [resolvable:$true] %s20
      %26 = dma.hbm_to_vmem [thread:$0]  %s1, 2048, %s21, [#allocation3], 128, 128, 8
    $region9: #{_nonlinear_padded.1} parent=1 // pred_fallthru
      _
    // Predicated region
    $region10: #{_nonlinear_padded.1} parent=1 // pred_check
      _
    $region11: #{_nonlinear_padded.1} parent=1 // pred_check_branch
      %28 = sbr.rel (0) target = $region13
    $region12: #{_nonlinear_padded.1} parent=1 // pred_region
      %s30 = ssub.s32 2048, 2048
      %31 = vsyncadd [#allocation6], %s30
      %s32 = sshll.u32 [#allocation5], 4
      %s33 = int_to_ptr.vmem [resolvable:$true] %s32
      %38 = dma.hbm_to_vmem [thread:$0]  %s2, 2048, %s33, [#allocation6], 128, 128, 8
    $region13: #{_nonlinear_padded.1} parent=1 // pred_fallthru
      _
    // Predicated region
    $region14: #{_nonlinear_padded.1} parent=1 // pred_check
      _
    $region15: #{_nonlinear_padded.1} parent=1 // pred_check_branch
      %40 = sbr.rel (0) target = $region17
    $region16: #{_nonlinear_padded.1} parent=1 // pred_region
      _
    $region17: #{_nonlinear_padded.1} parent=1 // pred_fallthru
      _
    // Predicated region
    $region18: #{_nonlinear_padded.1} parent=1 // pred_check
      _
    $region19: #{_nonlinear_padded.1} parent=1 // pred_check_branch
      %42 = sbr.rel (0) target = $region21
    $region20: #{_nonlinear_padded.1} parent=1 // pred_region
      _
    $region21: #{_nonlinear_padded.1} parent=1 // pred_fallthru
      _
    // Predicated region
    $region22: #{_nonlinear_padded.1} parent=1 // pred_check
      _
    $region23: #{_nonlinear_padded.1} parent=1 // pred_check_branch
      %44 = sbr.rel (0) target = $region25
    $region24: #{_nonlinear_padded.1} parent=1 // pred_region
      %45 = dma.done [#allocation3], 2048
    $region25: #{_nonlinear_padded.1} parent=1 // pred_fallthru
      _
    // Predicated region
    $region26: #{_nonlinear_padded.1} parent=1 // pred_check
      _
    $region27: #{_nonlinear_padded.1} parent=1 // pred_check_branch
      %47 = sbr.rel (0) target = $region29
    $region28: #{_nonlinear_padded.1} parent=1 // pred_region
      %48 = dma.done [#allocation6], 2048
    $region29: #{_nonlinear_padded.1} parent=1 // pred_fallthru
      _
    %v49 = vld [vmem:[%s0] sm:$0xff]
    %v50 = vld [vmem:[#allocation2] sm:$0xff]
    %v51 = vld [vmem:[#allocation2 + $0x8] sm:$0xff]
    %v52 = vld [vmem:[#allocation2 + $0x10] sm:$0xff]
    %v53 = vld [vmem:[#allocation2 + $0x18] sm:$0xff]
    %v54 = vld [vmem:[#allocation2 + $0x20] sm:$0xff]
    %v55 = vld [vmem:[#allocation2 + $0x28] sm:$0xff]
    %v56 = vld [vmem:[#allocation2 + $0x30] sm:$0xff]
    %v57 = vld [vmem:[#allocation2 + $0x38] sm:$0xff]
    %v58 = vld [vmem:[#allocation2 + $0x40] sm:$0xff]
    %v59 = vld [vmem:[#allocation2 + $0x48] sm:$0xff]
    %v60 = vld [vmem:[#allocation2 + $0x50] sm:$0xff]
    %v61 = vld [vmem:[#allocation2 + $0x58] sm:$0xff]
    %v62 = vld [vmem:[#allocation2 + $0x60] sm:$0xff]
    %v63 = vld [vmem:[#allocation2 + $0x68] sm:$0xff]
    %v64 = vld [vmem:[#allocation2 + $0x70] sm:$0xff]
    %v65 = vld [vmem:[#allocation2 + $0x78] sm:$0xff]
    %v66 = vld [vmem:[%s3] sm:$0x1]
    %v68 = vlaneseq
    %v69 = vshrl.u32 %v68, 7
    %v70 = vsub.s32 0, %v69
    %v71 = vrot.slane %v66, %v70
    %73 = vmatprep.subr.mxu0 0.0
    %74 = vmatpush1.msra.mxu0 %v50
    %75 = vmatprep.subr.mxu0 0.0
    %76 = vmatpush1.msra.mxu0 %v51
    %77 = vmatprep.subr.mxu0 0.0
    %78 = vmatpush1.msra.mxu0 %v52
    %79 = vmatprep.subr.mxu0 0.0
    %80 = vmatpush1.msra.mxu0 %v53
    %81 = vmatprep.subr.mxu0 0.0
    %82 = vmatpush1.msra.mxu0 %v54
    %83 = vmatprep.subr.mxu0 0.0
    %84 = vmatpush1.msra.mxu0 %v55
    %85 = vmatprep.subr.mxu0 0.0
    %86 = vmatpush1.msra.mxu0 %v56
    %87 = vmatprep.subr.mxu0 0.0
    %88 = vmatpush1.msra.mxu0 %v57
    %89 = vmatprep.subr.mxu0 0.0
    %90 = vmatpush1.msra.mxu0 %v58
    %91 = vmatprep.subr.mxu0 0.0
    %92 = vmatpush1.msra.mxu0 %v59
    %93 = vmatprep.subr.mxu0 0.0
    %94 = vmatpush1.msra.mxu0 %v60
    %95 = vmatprep.subr.mxu0 0.0
    %96 = vmatpush1.msra.mxu0 %v61
    %97 = vmatprep.subr.mxu0 0.0
    %98 = vmatpush1.msra.mxu0 %v62
    %99 = vmatprep.subr.mxu0 0.0
    %100 = vmatpush1.msra.mxu0 %v63
    %101 = vmatprep.subr.mxu0 0.0
    %102 = vmatpush1.msra.mxu0 %v64
    %103 = vmatprep.subr.mxu0 0.0
    %104 = vmatpush1.msra.mxu0 %v65
    %105 = vmatprep.subr.mxu0 0.0
    %106 = vmatpush1.msra.mxu0 0.0
    %107 = vmatprep.subr.mxu0 0.0
    %108 = vmatpush1.msra.mxu0 0.0
    %109 = vmatprep.subr.mxu0 0.0
    %110 = vmatpush1.msra.mxu0 0.0
    %111 = vmatprep.subr.mxu0 0.0
    %112 = vmatpush1.msra.mxu0 0.0
    %113 = vmatprep.subr.mxu0 0.0
    %114 = vmatpush1.msra.mxu0 0.0
    %115 = vmatprep.subr.mxu0 0.0
    %116 = vmatpush1.msra.mxu0 0.0
    %117 = vmatprep.subr.mxu0 0.0
    %118 = vmatpush1.msra.mxu0 0.0
    %119 = vmatprep.subr.mxu0 0.0
    %120 = vmatpush1.msra.mxu0 0.0
    %121 = vmatprep.subr.mxu0 0.0
    %122 = vmatpush1.msra.mxu0 0.0
    %123 = vmatprep.subr.mxu0 0.0
    %124 = vmatpush1.msra.mxu0 0.0
    %125 = vmatprep.subr.mxu0 0.0
    %126 = vmatpush1.msra.mxu0 0.0
    %127 = vmatprep.subr.mxu0 0.0
    %128 = vmatpush1.msra.mxu0 0.0
    %129 = vmatprep.subr.mxu0 0.0
    %130 = vmatpush1.msra.mxu0 0.0
    %131 = vmatprep.subr.mxu0 0.0
    %132 = vmatpush1.msra.mxu0 0.0
    %133 = vmatprep.subr.mxu0 0.0
    %134 = vmatpush1.msra.mxu0 0.0
    %135 = vmatprep.subr.mxu0 0.0
    %136 = vmatpush1.msra.mxu0 0.0
    %137 = vmatprep.mubr.f32.mxu0 0.0
    %138 = vmatmul.mubr.f32.gmra.mrb[0].mxu0 %v49
    %v139 = vpop.f32.mrb[0].mxu0
    %v140 = vadd.f32 %v71, %v139
    %v141 = vpop.f32.mrb[0].mxu0
    %142 = vdwg.mxu0
    %v143 = vld [vmem:[#allocation5] sm:$0xff]
    %v144 = vld [vmem:[#allocation5 + $0x8] sm:$0xff]
    %v145 = vld [vmem:[#allocation5 + $0x10] sm:$0xff]
    %v146 = vld [vmem:[#allocation5 + $0x18] sm:$0xff]
    %v147 = vld [vmem:[#allocation5 + $0x20] sm:$0xff]
    %v148 = vld [vmem:[#allocation5 + $0x28] sm:$0xff]
    %v149 = vld [vmem:[#allocation5 + $0x30] sm:$0xff]
    %v150 = vld [vmem:[#allocation5 + $0x38] sm:$0xff]
    %v151 = vld [vmem:[#allocation5 + $0x40] sm:$0xff]
    %v152 = vld [vmem:[#allocation5 + $0x48] sm:$0xff]
    %v153 = vld [vmem:[#allocation5 + $0x50] sm:$0xff]
    %v154 = vld [vmem:[#allocation5 + $0x58] sm:$0xff]
    %v155 = vld [vmem:[#allocation5 + $0x60] sm:$0xff]
    %v156 = vld [vmem:[#allocation5 + $0x68] sm:$0xff]
    %v157 = vld [vmem:[#allocation5 + $0x70] sm:$0xff]
    %v158 = vld [vmem:[#allocation5 + $0x78] sm:$0xff]
    %v159 = vld [vmem:[%s4] sm:$0x1]
    %v161 = vlaneseq
    %v162 = vshrl.u32 %v161, 7
    %v163 = vsub.s32 0, %v162
    %v164 = vrot.slane %v159, %v163
    %166 = vmatprep.subr.mxu0 0.0
    %167 = vmatpush1.msra.mxu0 %v143
    %168 = vmatprep.subr.mxu0 0.0
    %169 = vmatpush1.msra.mxu0 %v144
    %170 = vmatprep.subr.mxu0 0.0
    %171 = vmatpush1.msra.mxu0 %v145
    %172 = vmatprep.subr.mxu0 0.0
    %173 = vmatpush1.msra.mxu0 %v146
    %174 = vmatprep.subr.mxu0 0.0
    %175 = vmatpush1.msra.mxu0 %v147
    %176 = vmatprep.subr.mxu0 0.0
    %177 = vmatpush1.msra.mxu0 %v148
    %178 = vmatprep.subr.mxu0 0.0
    %179 = vmatpush1.msra.mxu0 %v149
    %180 = vmatprep.subr.mxu0 0.0
    %181 = vmatpush1.msra.mxu0 %v150
    %182 = vmatprep.subr.mxu0 0.0
    %183 = vmatpush1.msra.mxu0 %v151
    %184 = vmatprep.subr.mxu0 0.0
    %185 = vmatpush1.msra.mxu0 %v152
    %186 = vmatprep.subr.mxu0 0.0
    %187 = vmatpush1.msra.mxu0 %v153
    %188 = vmatprep.subr.mxu0 0.0
    %189 = vmatpush1.msra.mxu0 %v154
    %190 = vmatprep.subr.mxu0 0.0
    %191 = vmatpush1.msra.mxu0 %v155
    %192 = vmatprep.subr.mxu0 0.0
    %193 = vmatpush1.msra.mxu0 %v156
    %194 = vmatprep.subr.mxu0 0.0
    %195 = vmatpush1.msra.mxu0 %v157
    %196 = vmatprep.subr.mxu0 0.0
    %197 = vmatpush1.msra.mxu0 %v158
    %198 = vmatprep.subr.mxu0 0.0
    %199 = vmatpush1.msra.mxu0 0.0
    %200 = vmatprep.subr.mxu0 0.0
    %201 = vmatpush1.msra.mxu0 0.0
    %202 = vmatprep.subr.mxu0 0.0
    %203 = vmatpush1.msra.mxu0 0.0
    %204 = vmatprep.subr.mxu0 0.0
    %205 = vmatpush1.msra.mxu0 0.0
    %206 = vmatprep.subr.mxu0 0.0
    %207 = vmatpush1.msra.mxu0 0.0
    %208 = vmatprep.subr.mxu0 0.0
    %209 = vmatpush1.msra.mxu0 0.0
    %210 = vmatprep.subr.mxu0 0.0
    %211 = vmatpush1.msra.mxu0 0.0
    %212 = vmatprep.subr.mxu0 0.0
    %213 = vmatpush1.msra.mxu0 0.0
    %214 = vmatprep.subr.mxu0 0.0
    %215 = vmatpush1.msra.mxu0 0.0
    %216 = vmatprep.subr.mxu0 0.0
    %217 = vmatpush1.msra.mxu0 0.0
    %218 = vmatprep.subr.mxu0 0.0
    %219 = vmatpush1.msra.mxu0 0.0
    %220 = vmatprep.subr.mxu0 0.0
    %221 = vmatpush1.msra.mxu0 0.0
    %222 = vmatprep.subr.mxu0 0.0
    %223 = vmatpush1.msra.mxu0 0.0
    %224 = vmatprep.subr.mxu0 0.0
    %225 = vmatpush1.msra.mxu0 0.0
    %226 = vmatprep.subr.mxu0 0.0
    %227 = vmatpush1.msra.mxu0 0.0
    %228 = vmatprep.subr.mxu0 0.0
    %229 = vmatpush1.msra.mxu0 0.0
    %230 = vmatprep.mubr.f32.mxu0 0.0
    %231 = vmatmul.mubr.f32.gmra.mrb[0].mxu0 %v49
    %v232 = vpop.f32.mrb[0].mxu0
    %v233 = vadd.f32 %v164, %v232
    %v234 = vpop.f32.mrb[0].mxu0
    %235 = vdwg.mxu0
    %v236 = vtanh.pop %v140
    %v237 = vxor.u32 %v233, 2147483648
    %v238 = vmul.f32 %v237, 1.442695
    %v239 = vpow.pop %v238
    %v240 = vadd.f32 %v239, 1.0
    %v241 = vrcp.pop %v240
    %v242 = vmul.f32 1.0, %v241
    %v243 = vmul.f32 %v236, %v242
    %244 = vst [vmem:[#allocation7] sm:$0xff] %v243
    // Predicated region
    $region30: #{_nonlinear_padded.1} parent=1 // pred_check
      _
    $region31: #{_nonlinear_padded.1} parent=1 // pred_check_branch
      %246 = sbr.rel (0) target = $region33
    $region32: #{_nonlinear_padded.1} parent=1 // pred_region
      %s248 = ssub.s32 128, 128
      %249 = vsyncadd [#allocation4], %s248
      %s251 = sshll.u32 [#allocation7], 4
      %s252 = int_to_ptr.vmem [resolvable:$true] %s251
      %254 = dma.vmem_to_hbm [thread:$0]  %s252, 128, %s5, [#allocation4]
    $region33: #{_nonlinear_padded.1} parent=1 // pred_fallthru
      _
    // Predicated region
    $region34: #{_nonlinear_padded.1} parent=1 // pred_check
      _
    $region35: #{_nonlinear_padded.1} parent=1 // pred_check_branch
      %256 = sbr.rel (0) target = $region37
    $region36: #{_nonlinear_padded.1} parent=1 // pred_region
      %257 = dma.done [#allocation4], 128
    $region37: #{_nonlinear_padded.1} parent=1 // pred_fallthru
      _
    %258 = vsyncpa [#allocation3], 1
    %259 = vsyncpa [#allocation6], 1
    %260 = vsyncpa [#allocation4], 1

// kernel: _nonlinear_padded.1
$region0: #{_nonlinear_padded.1}
  #allocation0 [shape = 'u32[]', space=smem, size = 0x4, offset = 0x4, fixed_abs, tag = 'smem constant byte address 0x4 - core index']
  #allocation1 [shape = 'u32[144,128]{1,0:T(1,128)}', space=vmem, size = 0x12000, scoped, tag = 'internal scratch']
  %s0 = inlined_call_operand.vmem [shape: f32[8,128], index: 0, kind: input, shape index: {}]
  %s1 = inlined_call_operand.hbm [shape: f32[128,128], index: 1, kind: input, shape index: {}]
  %s2 = inlined_call_operand.hbm [shape: f32[128,128], index: 2, kind: input, shape index: {}]
  %s3 = inlined_call_operand.vmem [shape: f32[1,128], index: 3, kind: input, shape index: {}]
  %s4 = inlined_call_operand.vmem [shape: f32[1,128], index: 4, kind: input, shape index: {}]
  %s5 = inlined_call_operand.hbm [shape: f32[8,128], index: 5, kind: output, shape index: {}]
  %s6 = sld [smem:[#allocation0]]
  $region38: #{_nonlinear_padded.1} parent=0
    _
  %s8 = ssub.s32 1, %s6
  %s9 = scalar_select 0, %s8, %s6
  $region1: #{_nonlinear_padded.1} parent=0
    #allocation2 [shape = 'u8[65536]{0}', space=vmem, size = 0x10000, scoped, tag = 'input window, operand 1, single buffered']
    #allocation3 [shape = 's32[1]{0}', space=sflag, size = 0x4, scoped, tag = 'scoped memory for _nonlinear_padded.1']
    #allocation4 [shape = 's32[1]{0}', space=sflag, size = 0x4, scoped, tag = 'scoped memory for _nonlinear_padded.1']
    #allocation5 [shape = 'u8[65536]{0}', space=vmem, size = 0x10000, scoped, tag = 'input window, operand 2, single buffered']
    #allocation6 [shape = 's32[1]{0}', space=sflag, size = 0x4, scoped, tag = 'scoped memory for _nonlinear_padded.1']
    #allocation7 [shape = 'u8[4096]{0}', space=vmem, size = 0x1000, scoped, tag = 'output window, operand 0, single buffered']
    %10 = vsyncpa [#allocation3], 0
    %11 = vsyncpa [#allocation6], 0
    %12 = vsyncpa [#allocation4], 0
    // Predicated region
    $region2: #{_nonlinear_padded.1} parent=1 // pred_check
      _
    $region3: #{_nonlinear_padded.1} parent=1 // pred_check_branch
      %14 = sbr.rel (0) target = $region5
    $region4: #{_nonlinear_padded.1} parent=1 // pred_region
      _
    $region5: #{_nonlinear_padded.1} parent=1 // pred_fallthru
      _
    // Predicated region
    $region6: #{_nonlinear_padded.1} parent=1 // pred_check
      _
    $region7: #{_nonlinear_padded.1} parent=1 // pred_check_branch
      %16 = sbr.rel (0) target = $region9
    $region8: #{_nonlinear_padded.1} parent=1 // pred_region
      %s18 = ssub.s32 2048, 2048
      %19 = vsyncadd [#allocation3], %s18
      %s20 = sshll.u32 [#allocation2], 4
      %s21 = int_to_ptr.vmem [resolvable:$true] %s20
      %26 = dma.hbm_to_vmem [thread:$0]  %s1, 2048, %s21, [#allocation3], 128, 128, 8
    $region9: #{_nonlinear_padded.1} parent=1 // pred_fallthru
      _
    // Predicated region
    $region10: #{_nonlinear_padded.1} parent=1 // pred_check
      _
    $region11: #{_nonlinear_padded.1} parent=1 // pred_check_branch
      %28 = sbr.rel (0) target = $region13
    $region12: #{_nonlinear_padded.1} parent=1 // pred_region
      %s30 = ssub.s32 2048, 2048
      %31 = vsyncadd [#allocation6], %s30
      %s32 = sshll.u32 [#allocation5], 4
      %s33 = int_to_ptr.vmem [resolvable:$true] %s32
      %38 = dma.hbm_to_vmem [thread:$0]  %s2, 2048, %s33, [#allocation6], 128, 128, 8
    $region13: #{_nonlinear_padded.1} parent=1 // pred_fallthru
      _
    // Predicated region
    $region14: #{_nonlinear_padded.1} parent=1 // pred_check
      _
    $region15: #{_nonlinear_padded.1} parent=1 // pred_check_branch
      %40 = sbr.rel (0) target = $region17
    $region16: #{_nonlinear_padded.1} parent=1 // pred_region
      _
    $region17: #{_nonlinear_padded.1} parent=1 // pred_fallthru
      _
    // Predicated region
    $region18: #{_nonlinear_padded.1} parent=1 // pred_check
      _
    $region19: #{_nonlinear_padded.1} parent=1 // pred_check_branch
      %42 = sbr.rel (0) target = $region21
    $region20: #{_nonlinear_padded.1} parent=1 // pred_region
      _
    $region21: #{_nonlinear_padded.1} parent=1 // pred_fallthru
      _
    // Predicated region
    $region22: #{_nonlinear_padded.1} parent=1 // pred_check
      _
    $region23: #{_nonlinear_padded.1} parent=1 // pred_check_branch
      %44 = sbr.rel (0) target = $region25
    $region24: #{_nonlinear_padded.1} parent=1 // pred_region
      %45 = dma.done [#allocation3], 2048
    $region25: #{_nonlinear_padded.1} parent=1 // pred_fallthru
      _
    // Predicated region
    $region26: #{_nonlinear_padded.1} parent=1 // pred_check
      _
    $region27: #{_nonlinear_padded.1} parent=1 // pred_check_branch
      %47 = sbr.rel (0) target = $region29
    $region28: #{_nonlinear_padded.1} parent=1 // pred_region
      %48 = dma.done [#allocation6], 2048
    $region29: #{_nonlinear_padded.1} parent=1 // pred_fallthru
      _
    %v49 = vld [vmem:[%s0] sm:$0xff]
    %v50 = vld [vmem:[#allocation2] sm:$0xff]
    %v51 = vld [vmem:[#allocation2 + $0x8] sm:$0xff]
    %v52 = vld [vmem:[#allocation2 + $0x10] sm:$0xff]
    %v53 = vld [vmem:[#allocation2 + $0x18] sm:$0xff]
    %v54 = vld [vmem:[#allocation2 + $0x20] sm:$0xff]
    %v55 = vld [vmem:[#allocation2 + $0x28] sm:$0xff]
    %v56 = vld [vmem:[#allocation2 + $0x30] sm:$0xff]
    %v57 = vld [vmem:[#allocation2 + $0x38] sm:$0xff]
    %v58 = vld [vmem:[#allocation2 + $0x40] sm:$0xff]
    %v59 = vld [vmem:[#allocation2 + $0x48] sm:$0xff]
    %v60 = vld [vmem:[#allocation2 + $0x50] sm:$0xff]
    %v61 = vld [vmem:[#allocation2 + $0x58] sm:$0xff]
    %v62 = vld [vmem:[#allocation2 + $0x60] sm:$0xff]
    %v63 = vld [vmem:[#allocation2 + $0x68] sm:$0xff]
    %v64 = vld [vmem:[#allocation2 + $0x70] sm:$0xff]
    %v65 = vld [vmem:[#allocation2 + $0x78] sm:$0xff]
    %v66 = vld [vmem:[%s3] sm:$0x1]
    %v68 = vlaneseq
    %v69 = vshrl.u32 %v68, 7
    %v70 = vsub.s32 0, %v69
    %v71 = vrot.slane %v66, %v70
    %73 = vmatprep.subr.mxu0 0.0
    %74 = vmatpush1.msra.mxu0 %v50
    %75 = vmatprep.subr.mxu0 0.0
    %76 = vmatpush1.msra.mxu0 %v51
    %77 = vmatprep.subr.mxu0 0.0
    %78 = vmatpush1.msra.mxu0 %v52
    %79 = vmatprep.subr.mxu0 0.0
    %80 = vmatpush1.msra.mxu0 %v53
    %81 = vmatprep.subr.mxu0 0.0
    %82 = vmatpush1.msra.mxu0 %v54
    %83 = vmatprep.subr.mxu0 0.0
    %84 = vmatpush1.msra.mxu0 %v55
    %85 = vmatprep.subr.mxu0 0.0
    %86 = vmatpush1.msra.mxu0 %v56
    %87 = vmatprep.subr.mxu0 0.0
    %88 = vmatpush1.msra.mxu0 %v57
    %89 = vmatprep.subr.mxu0 0.0
    %90 = vmatpush1.msra.mxu0 %v58
    %91 = vmatprep.subr.mxu0 0.0
    %92 = vmatpush1.msra.mxu0 %v59
    %93 = vmatprep.subr.mxu0 0.0
    %94 = vmatpush1.msra.mxu0 %v60
    %95 = vmatprep.subr.mxu0 0.0
    %96 = vmatpush1.msra.mxu0 %v61
    %97 = vmatprep.subr.mxu0 0.0
    %98 = vmatpush1.msra.mxu0 %v62
    %99 = vmatprep.subr.mxu0 0.0
    %100 = vmatpush1.msra.mxu0 %v63
    %101 = vmatprep.subr.mxu0 0.0
    %102 = vmatpush1.msra.mxu0 %v64
    %103 = vmatprep.subr.mxu0 0.0
    %104 = vmatpush1.msra.mxu0 %v65
    %105 = vmatprep.subr.mxu0 0.0
    %106 = vmatpush1.msra.mxu0 0.0
    %107 = vmatprep.subr.mxu0 0.0
    %108 = vmatpush1.msra.mxu0 0.0
    %109 = vmatprep.subr.mxu0 0.0
    %110 = vmatpush1.msra.mxu0 0.0
    %111 = vmatprep.subr.mxu0 0.0
    %112 = vmatpush1.msra.mxu0 0.0
    %113 = vmatprep.subr.mxu0 0.0
    %114 = vmatpush1.msra.mxu0 0.0
    %115 = vmatprep.subr.mxu0 0.0
    %116 = vmatpush1.msra.mxu0 0.0
    %117 = vmatprep.subr.mxu0 0.0
    %118 = vmatpush1.msra.mxu0 0.0
    %119 = vmatprep.subr.mxu0 0.0
    %120 = vmatpush1.msra.mxu0 0.0
    %121 = vmatprep.subr.mxu0 0.0
    %122 = vmatpush1.msra.mxu0 0.0
    %123 = vmatprep.subr.mxu0 0.0
    %124 = vmatpush1.msra.mxu0 0.0
    %125 = vmatprep.subr.mxu0 0.0
    %126 = vmatpush1.msra.mxu0 0.0
    %127 = vmatprep.subr.mxu0 0.0
    %128 = vmatpush1.msra.mxu0 0.0
    %129 = vmatprep.subr.mxu0 0.0
    %130 = vmatpush1.msra.mxu0 0.0
    %131 = vmatprep.subr.mxu0 0.0
    %132 = vmatpush1.msra.mxu0 0.0
    %133 = vmatprep.subr.mxu0 0.0
    %134 = vmatpush1.msra.mxu0 0.0
    %135 = vmatprep.subr.mxu0 0.0
    %136 = vmatpush1.msra.mxu0 0.0
    %137 = vmatprep.mubr.f32.mxu0 0.0
    %138 = vmatmul.mubr.f32.gmra.mrb[0].mxu0 %v49
    %v139 = vpop.f32.mrb[0].mxu0
    %v140 = vadd.f32 %v71, %v139
    %v141 = vpop.f32.mrb[0].mxu0
    %142 = vdwg.mxu0
    %v143 = vld [vmem:[#allocation5] sm:$0xff]
    %v144 = vld [vmem:[#allocation5 + $0x8] sm:$0xff]
    %v145 = vld [vmem:[#allocation5 + $0x10] sm:$0xff]
    %v146 = vld [vmem:[#allocation5 + $0x18] sm:$0xff]
    %v147 = vld [vmem:[#allocation5 + $0x20] sm:$0xff]
    %v148 = vld [vmem:[#allocation5 + $0x28] sm:$0xff]
    %v149 = vld [vmem:[#allocation5 + $0x30] sm:$0xff]
    %v150 = vld [vmem:[#allocation5 + $0x38] sm:$0xff]
    %v151 = vld [vmem:[#allocation5 + $0x40] sm:$0xff]
    %v152 = vld [vmem:[#allocation5 + $0x48] sm:$0xff]
    %v153 = vld [vmem:[#allocation5 + $0x50] sm:$0xff]
    %v154 = vld [vmem:[#allocation5 + $0x58] sm:$0xff]
    %v155 = vld [vmem:[#allocation5 + $0x60] sm:$0xff]
    %v156 = vld [vmem:[#allocation5 + $0x68] sm:$0xff]
    %v157 = vld [vmem:[#allocation5 + $0x70] sm:$0xff]
    %v158 = vld [vmem:[#allocation5 + $0x78] sm:$0xff]
    %v159 = vld [vmem:[%s4] sm:$0x1]
    %v161 = vlaneseq
    %v162 = vshrl.u32 %v161, 7
    %v163 = vsub.s32 0, %v162
    %v164 = vrot.slane %v159, %v163
    %166 = vmatprep.subr.mxu0 0.0
    %167 = vmatpush1.msra.mxu0 %v143
    %168 = vmatprep.subr.mxu0 0.0
    %169 = vmatpush1.msra.mxu0 %v144
    %170 = vmatprep.subr.mxu0 0.0
    %171 = vmatpush1.msra.mxu0 %v145
    %172 = vmatprep.subr.mxu0 0.0
    %173 = vmatpush1.msra.mxu0 %v146
    %174 = vmatprep.subr.mxu0 0.0
    %175 = vmatpush1.msra.mxu0 %v147
    %176 = vmatprep.subr.mxu0 0.0
    %177 = vmatpush1.msra.mxu0 %v148
    %178 = vmatprep.subr.mxu0 0.0
    %179 = vmatpush1.msra.mxu0 %v149
    %180 = vmatprep.subr.mxu0 0.0
    %181 = vmatpush1.msra.mxu0 %v150
    %182 = vmatprep.subr.mxu0 0.0
    %183 = vmatpush1.msra.mxu0 %v151
    %184 = vmatprep.subr.mxu0 0.0
    %185 = vmatpush1.msra.mxu0 %v152
    %186 = vmatprep.subr.mxu0 0.0
    %187 = vmatpush1.msra.mxu0 %v153
    %188 = vmatprep.subr.mxu0 0.0
    %189 = vmatpush1.msra.mxu0 %v154
    %190 = vmatprep.subr.mxu0 0.0
    %191 = vmatpush1.msra.mxu0 %v155
    %192 = vmatprep.subr.mxu0 0.0
    %193 = vmatpush1.msra.mxu0 %v156
    %194 = vmatprep.subr.mxu0 0.0
    %195 = vmatpush1.msra.mxu0 %v157
    %196 = vmatprep.subr.mxu0 0.0
    %197 = vmatpush1.msra.mxu0 %v158
    %198 = vmatprep.subr.mxu0 0.0
    %199 = vmatpush1.msra.mxu0 0.0
    %200 = vmatprep.subr.mxu0 0.0
    %201 = vmatpush1.msra.mxu0 0.0
    %202 = vmatprep.subr.mxu0 0.0
    %203 = vmatpush1.msra.mxu0 0.0
    %204 = vmatprep.subr.mxu0 0.0
    %205 = vmatpush1.msra.mxu0 0.0
    %206 = vmatprep.subr.mxu0 0.0
    %207 = vmatpush1.msra.mxu0 0.0
    %208 = vmatprep.subr.mxu0 0.0
    %209 = vmatpush1.msra.mxu0 0.0
    %210 = vmatprep.subr.mxu0 0.0
    %211 = vmatpush1.msra.mxu0 0.0
    %212 = vmatprep.subr.mxu0 0.0
    %213 = vmatpush1.msra.mxu0 0.0
    %214 = vmatprep.subr.mxu0 0.0
    %215 = vmatpush1.msra.mxu0 0.0
    %216 = vmatprep.subr.mxu0 0.0
    %217 = vmatpush1.msra.mxu0 0.0
    %218 = vmatprep.subr.mxu0 0.0
    %219 = vmatpush1.msra.mxu0 0.0
    %220 = vmatprep.subr.mxu0 0.0
    %221 = vmatpush1.msra.mxu0 0.0
    %222 = vmatprep.subr.mxu0 0.0
    %223 = vmatpush1.msra.mxu0 0.0
    %224 = vmatprep.subr.mxu0 0.0
    %225 = vmatpush1.msra.mxu0 0.0
    %226 = vmatprep.subr.mxu0 0.0
    %227 = vmatpush1.msra.mxu0 0.0
    %228 = vmatprep.subr.mxu0 0.0
    %229 = vmatpush1.msra.mxu0 0.0
    %230 = vmatprep.mubr.f32.mxu0 0.0
    %231 = vmatmul.mubr.f32.gmra.mrb[0].mxu0 %v49
    %v232 = vpop.f32.mrb[0].mxu0
    %v233 = vadd.f32 %v164, %v232
    %v234 = vpop.f32.mrb[0].mxu0
    %235 = vdwg.mxu0
    %v236 = vtanh.pop %v140
    %v237 = vxor.u32 %v233, 2147483648
    %v238 = vmul.f32 %v237, 1.442695
    %v239 = vpow.pop %v238
    %v240 = vadd.f32 %v239, 1.0
    %v241 = vrcp.pop %v240
    %v242 = vmul.f32 1.0, %v241
    %v243 = vmul.f32 %v236, %v242
    %244 = vst [vmem:[#allocation7] sm:$0xff] %v243
    // Predicated region
    $region30: #{_nonlinear_padded.1} parent=1 // pred_check
      _
    $region31: #{_nonlinear_padded.1} parent=1 // pred_check_branch
      %246 = sbr.rel (0) target = $region33
    $region32: #{_nonlinear_padded.1} parent=1 // pred_region
      %s248 = ssub.s32 128, 128
      %249 = vsyncadd [#allocation4], %s248
      %s251 = sshll.u32 [#allocation7], 4
      %s252 = int_to_ptr.vmem [resolvable:$true] %s251
      %254 = dma.vmem_to_hbm [thread:$0]  %s252, 128, %s5, [#allocation4]
    $region33: #{_nonlinear_padded.1} parent=1 // pred_fallthru
      _
    // Predicated region
    $region34: #{_nonlinear_padded.1} parent=1 // pred_check
      _
    $region35: #{_nonlinear_padded.1} parent=1 // pred_check_branch
      %256 = sbr.rel (0) target = $region37
    $region36: #{_nonlinear_padded.1} parent=1 // pred_region
      %257 = dma.done [#allocation4], 128
    $region37: #{_nonlinear_padded.1} parent=1 // pred_fallthru
      _
    %258 = vsyncpa [#allocation3], 1
    %259 = vsyncpa [#allocation6], 1
    %260 = vsyncpa [#allocation4], 1

</llo_original>
